<compile_context>
chip_gen: v5e
topology: v5e:2x2
jax: 0.10.0
libtpu: 0.0.40
codegen_flags: <defaults>
</compile_context>

<pallas_src>
import functools

import jax
import jax.numpy as jnp
from jax import lax
from jax.experimental import pallas as pl
from jax.experimental.pallas import tpu as pltpu


# ----------------------------------------------------------------------------
# Pallas kernel: accumulate the raw gram difference over HW tiles.
# ----------------------------------------------------------------------------
def _style_gram_diff_kernel(phi1_ref, phi2_ref, out_ref, acc_ref):
    k = pl.program_id(2)

    @pl.when(k == 0)
    def _():
        acc_ref[...] = jnp.zeros_like(acc_ref)

    # (1, C, TILE_HW) block -> (C, TILE_HW); MXU with f32 accumulation.
    p1 = phi1_ref[0]
    p2 = phi2_ref[0]

    # NT matmul: contract the HW (last) axis of both operands -> (C, C) gram.
    dn = (((1,), (1,)), ((), ()))
    g1 = lax.dot_general(p1, p1, dimension_numbers=dn,
                         preferred_element_type=jnp.float32)
    g2 = lax.dot_general(p2, p2, dimension_numbers=dn,
                         preferred_element_type=jnp.float32)
    acc_ref[...] += g1 - g2

    @pl.when(k == pl.num_programs(2) - 1)
    def _():
        out_ref[0, 0] = acc_ref[...]


# ----------------------------------------------------------------------------
# Tile selection from a VMEM byte budget.
# ----------------------------------------------------------------------------
def _round_up(x, m):
    return ((x + m - 1) // m) * m


def _vmem_capacity_bytes():
    try:
        return int(pltpu.get_tpu_info().vmem_capacity_bytes)
    except Exception:
        return 64 * 1024 * 1024  # conservative fallback (v7x-sized)


def _choose_tile_hw(hw, c, itemsize, input_budget_bytes, max_tile_hw=None):
    """Return (tile_hw, hw_padded).

    tile_hw is a multiple of 128 whose double-buffered 2-input footprint
    (2 inputs * 2 buffers * C * tile_hw * itemsize) fits in input_budget_bytes;
    hw_padded is a multiple of tile_hw (zero-pad columns are gram-neutral).
    """
    hw128 = _round_up(hw, 128)
    cap = input_budget_bytes // (4 * c * itemsize)
    cap = max(128, (cap // 128) * 128)
    if max_tile_hw is not None:
        cap = max(128, min(cap, (max_tile_hw // 128) * 128))
    if hw128 <= cap:
        return hw128, hw128
    # Prefer an exact divisor of hw128 near the cap to minimize zero padding.
    t = cap
    while t >= max(128, cap // 2):
        if hw128 % t == 0:
            return t, hw128
        t -= 128
    return cap, _round_up(hw, cap)


# ----------------------------------------------------------------------------
# StyleLoss hot path
# ----------------------------------------------------------------------------
def style_loss_pallas(phi1, phi2, *, max_tile_hw=None):
    """phi1, phi2: (B, C, H, W) feature maps (output of relu3_3), f32 or bf16."""
    assert phi1.shape == phi2.shape
    B, C, H, W = phi1.shape
    HW = H * W
    itemsize = jnp.dtype(phi1.dtype).itemsize

    # Free reshape (contiguous); no dtype cast here -- the kernel consumes the
    # features as produced (f32 faithful mode, or bf16 fused into relu3_3).
    psi1 = phi1.reshape(B, C, HW)
    psi2 = phi2.reshape(B, C, HW)

    # Per-generation VMEM budget: v7x 64 MiB phys -> ~32 MiB target,
    # v5e/v6e 128 MiB phys -> ~64 MiB target.  Set vmem_limit_bytes explicitly
    # so v5e's 16 MiB scoped default does not bite.
    phys_vmem = _vmem_capacity_bytes()
    vmem_target = int(min(phys_vmem // 2, 96 * 1024 * 1024))
    acc_bytes = C * C * 4
    out_blk_bytes = C * C * 4
    input_budget = max(4 * 1024 * 1024,
                       vmem_target - acc_bytes - 2 * out_blk_bytes - (4 << 20))

    tile_hw, hw_pad = _choose_tile_hw(HW, C, itemsize, input_budget, max_tile_hw)
    if hw_pad != HW:
        pad = hw_pad - HW
        psi1 = jnp.pad(psi1, ((0, 0), (0, 0), (0, pad)))
        psi2 = jnp.pad(psi2, ((0, 0), (0, 0), (0, pad)))

    num_k = hw_pad // tile_hw
    # Split the HW reduction across two partial accumulators when B == 1 so
    # both of v7x's TensorCores get work (negligible cost on single-TC chips).
    n_split = 2 if (B == 1 and num_k >= 2 and num_k % 2 == 0) else 1
    nks = num_k // n_split

    def in_idx(s, b, k):
        return (b, 0, s * nks + k)

    # Deeper input buffering only when tiles are small (hides DMA issue
    # latency); large tiles stay double-buffered to respect the VMEM budget.
    blk_bytes = C * tile_hw * itemsize
    buffered = (blk_bytes <= (2 << 20)) and (nks >= 4)
    spec_kwargs = {"pipeline_mode": pl.Buffered(3)} if buffered else {}
    in_specs = [
        pl.BlockSpec((1, C, tile_hw), in_idx, **spec_kwargs),
        pl.BlockSpec((1, C, tile_hw), in_idx, **spec_kwargs),
    ]
    out_spec = pl.BlockSpec((1, 1, C, C), lambda s, b, k: (s, b, 0, 0))

    gram_diff = pl.pallas_call(
        _style_gram_diff_kernel,
        out_shape=jax.ShapeDtypeStruct((n_split, B, C, C), jnp.float32),
        grid_spec=pltpu.PrefetchScalarGridSpec(
            num_scalar_prefetch=0,
            grid=(n_split, B, nks),
            in_specs=in_specs,
            out_specs=out_spec,
            scratch_shapes=[pltpu.VMEM((C, C), jnp.float32)],
        ),
        compiler_params=pltpu.CompilerParams(
            dimension_semantics=("parallel", "parallel", "arbitrary"),
            vmem_limit_bytes=vmem_target,
        ),
        cost_estimate=pl.CostEstimate(
            flops=4 * B * C * C * hw_pad,
            transcendentals=0,
            bytes_accessed=2 * B * C * hw_pad * itemsize + n_split * B * C * C * 4,
        ),
    )(psi1, psi2)

    # Tiny finalize in plain JAX on (B, C, C): combine split partials, fold the
    # 1/(c*h*w) scale into one scalar multiply of the Frobenius norm.
    diff = jnp.sum(gram_diff, axis=0)                      # (B, C, C) raw gram diff
    inv_denom = jnp.float32(1.0 / float(C * H * W))
    norms = jnp.sqrt(jnp.sum(diff * diff, axis=(1, 2))) * inv_denom
    loss = jnp.sum(norms) / jnp.float32(B)
    # PyTorch: if inf/nan -> return 0.0
    return jnp.where(jnp.isfinite(loss), loss, jnp.float32(0.0))


# ----------------------------------------------------------------------------
# Synthetic "relu3_3" feature extractor (deterministic conv3x3 + ReLU).
# ----------------------------------------------------------------------------
# TODO(synk): real relu3_3 is a pretrained VGG prefix; synthesized here with
# deterministic weights since no checkpoint loading is allowed.
def make_relu3_3(key, c_in=3, c_feat=32, out_dtype=jnp.float32):
    w = jax.random.normal(key, (c_feat, c_in, 3, 3), dtype=jnp.float32) * 0.1

    def relu3_3(x_nchw):
        y = lax.conv_general_dilated(
            x_nchw, w,
            window_strides=(1, 1),
            padding="SAME",
            dimension_numbers=("NCHW", "OIHW", "NCHW"),
        )
        # Cast (if any) is part of the conv/ReLU epilogue fusion -- never a
        # standalone HBM pass over the feature maps.
        return jnp.maximum(y, 0.0).astype(out_dtype)

    return relu3_3


# ----------------------------------------------------------------------------
# Full StyleLoss forward (matches the PyTorch module's forward)
# ----------------------------------------------------------------------------
def style_loss_forward(relu3_3, img1, img2, *, max_tile_hw=None):
    if img1.ndim == 3:
        img1 = img1[None]
        img2 = img2[None]
    phi1 = relu3_3(img1)
    phi2 = relu3_3(img2)
    return style_loss_pallas(phi1, phi2, max_tile_hw=max_tile_hw)


def _style_loss_ref(phi1, phi2):
    """Pure-JAX reference on the same features (high-precision matmuls)."""
    B, C, H, W = phi1.shape
    psi1 = phi1.reshape(B, C, H * W)
    psi2 = phi2.reshape(B, C, H * W)
    g1 = jnp.einsum("bcn,bdn->bcd", psi1, psi1,
                    preferred_element_type=jnp.float32,
                    precision=lax.Precision.HIGHEST) / (C * H * W)
    g2 = jnp.einsum("bcn,bdn->bcd", psi2, psi2,
                    preferred_element_type=jnp.float32,
                    precision=lax.Precision.HIGHEST) / (C * H * W)
    norms = jnp.sqrt(jnp.sum((g1 - g2) ** 2, axis=(1, 2)))
    loss = jnp.sum(norms) / B
    return jnp.where(jnp.isfinite(loss), loss, jnp.float32(0.0))


if __name__ == "__main__":
    key = jax.random.PRNGKey(0)
    k_w, k_1, k_2 = jax.random.split(key, 3)

    relu3_3 = make_relu3_3(k_w, c_in=3, c_feat=32, out_dtype=jnp.float32)

    # --- 1) default path: batch=2, channels=3, spatial=16x16, f32 features ---
    img1 = jax.random.normal(k_1, (2, 3, 16, 16), dtype=jnp.float32)
    img2 = jax.random.normal(k_2, (2, 3, 16, 16), dtype=jnp.float32)
    loss = style_loss_forward(relu3_3, img1, img2)
    jax.block_until_ready(loss)
    ref = _style_loss_ref(relu3_3(img1), relu3_3(img2))
    assert jnp.allclose(loss, ref, rtol=2e-2, atol=1e-6), (loss, ref)

    # --- 2) 3-D input (B=1) + small tiles: multi-tile reduction and the
    #        two-way HW split (two partial accumulators, combined in wrapper) --
    loss_s = style_loss_forward(relu3_3, img1[0], img2[0], max_tile_hw=128)
    jax.block_until_ready(loss_s)
    ref_s = _style_loss_ref(relu3_3(img1[:1]), relu3_3(img2[:1]))
    assert jnp.allclose(loss_s, ref_s, rtol=2e-2, atol=1e-6), (loss_s, ref_s)

    # --- 3) bf16 fast path: cast fused into the relu3_3 epilogue ---
    relu3_3_bf16 = make_relu3_3(k_w, c_in=3, c_feat=32, out_dtype=jnp.bfloat16)
    loss_bf = style_loss_forward(relu3_3_bf16, img1, img2)
    jax.block_until_ready(loss_bf)
    ref_bf = _style_loss_ref(relu3_3_bf16(img1), relu3_3_bf16(img2))
    assert jnp.allclose(loss_bf, ref_bf, rtol=2e-2, atol=1e-6), (loss_bf, ref_bf)

    # --- 4) odd resolution (HW % 128 != 0): zero-pad path (15x15 -> 256) ---
    img1_o = jax.random.normal(k_1, (2, 3, 15, 15), dtype=jnp.float32)
    img2_o = jax.random.normal(k_2, (2, 3, 15, 15), dtype=jnp.float32)
    loss_o = style_loss_forward(relu3_3, img1_o, img2_o)
    jax.block_until_ready(loss_o)
    ref_o = _style_loss_ref(relu3_3(img1_o), relu3_3(img2_o))
    assert jnp.allclose(loss_o, ref_o, rtol=2e-2, atol=1e-6), (loss_o, ref_o)

    # --- 5) many small tiles: exercises the pl.Buffered(3) input pipelining ---
    img1_b = jax.random.normal(k_1, (2, 3, 32, 32), dtype=jnp.float32)
    img2_b = jax.random.normal(k_2, (2, 3, 32, 32), dtype=jnp.float32)
    loss_b = style_loss_forward(relu3_3, img1_b, img2_b, max_tile_hw=128)
    jax.block_until_ready(loss_b)
    ref_b = _style_loss_ref(relu3_3(img1_b), relu3_3(img2_b))
    assert jnp.allclose(loss_b, ref_b, rtol=2e-2, atol=1e-6), (loss_b, ref_b)

    print("KERNEL_OK")
</pallas_src>

<mosaic_0001>
module attributes {stable_mosaic.version = 11 : i64} {
  func.func @_style_gram_diff_kernel(%arg0: i32, %arg1: i32, %arg2: i32, %arg3: memref<1x32x256xf32, #tpu.memory_space<vmem>>, %arg4: memref<1x32x256xf32, #tpu.memory_space<vmem>>, %arg5: memref<1x1x32x32xf32, #tpu.memory_space<vmem>>, %arg6: memref<32x32xf32, #tpu.memory_space<vmem>>) attributes {dimension_semantics = [#tpu.dimension_semantics<parallel>, #tpu.dimension_semantics<parallel>, #tpu.dimension_semantics<arbitrary>], iteration_bounds = array<i64: 1, 2, 1>, scalar_prefetch = 0 : i64, scratch_operands = 1 : i64, tpu.core_type = #tpu.core_type<tc>, window_params = [{transform_indices = @transform_0, window_bounds = array<i64: 1, 32, 256>}, {transform_indices = @transform_1, window_bounds = array<i64: 1, 32, 256>}, {transform_indices = @transform_2, window_bounds = array<i64: 1, 1, 32, 32>}]} {
    %c0_i32 = arith.constant 0 : i32
    %0 = arith.cmpi eq, %arg2, %c0_i32 : i32
    %1 = arith.extui %0 : i1 to i32
    %c0_i32_0 = arith.constant 0 : i32
    %2 = arith.cmpi ne, %1, %c0_i32_0 : i32
    scf.if %2 {
      %cst_13 = arith.constant 0.000000e+00 : f32
      %16 = vector.broadcast %cst_13 : f32 to vector<32x32xf32>
      %c0_14 = arith.constant 0 : index
      %c0_15 = arith.constant 0 : index
      %17 = vector.load %arg6[%c0_14, %c0_15] : memref<32x32xf32, #tpu.memory_space<vmem>>, vector<32x32xf32>
      tpu.vector_store %arg6[%c0_14, %c0_15], %16 {strides = array<i32>} : memref<32x32xf32, #tpu.memory_space<vmem>>, vector<32x32xf32>,
    } else {
    }
    %c0 = arith.constant 0 : index
    %c0_1 = arith.constant 0 : index
    %c0_2 = arith.constant 0 : index
    %3 = vector.load %arg3[%c0, %c0_1, %c0_2] : memref<1x32x256xf32, #tpu.memory_space<vmem>>, vector<1x32x256xf32>
    %4 = vector.shape_cast %3 : vector<1x32x256xf32> to vector<32x256xf32>
    %c0_3 = arith.constant 0 : index
    %c0_4 = arith.constant 0 : index
    %c0_5 = arith.constant 0 : index
    %5 = vector.load %arg4[%c0_3, %c0_4, %c0_5] : memref<1x32x256xf32, #tpu.memory_space<vmem>>, vector<1x32x256xf32>
    %6 = vector.shape_cast %5 : vector<1x32x256xf32> to vector<32x256xf32>
    %cst = arith.constant dense<0.000000e+00> : vector<32x32xf32>
    %7 = tpu.matmul %4, %4, %cst {dimension_numbers = #tpu.dot_dimension_numbers<[1], [1], [0], [0], [0, 0, 1, 0], [], []>} : vector<32x256xf32>, vector<32x256xf32>, vector<32x32xf32> -> vector<32x32xf32>
    %cst_6 = arith.constant dense<0.000000e+00> : vector<32x32xf32>
    %8 = tpu.matmul %6, %6, %cst_6 {dimension_numbers = #tpu.dot_dimension_numbers<[1], [1], [0], [0], [0, 0, 1, 0], [], []>} : vector<32x256xf32>, vector<32x256xf32>, vector<32x32xf32> -> vector<32x32xf32>
    %c0_7 = arith.constant 0 : index
    %c0_8 = arith.constant 0 : index
    %9 = vector.load %arg6[%c0_7, %c0_8] : memref<32x32xf32, #tpu.memory_space<vmem>>, vector<32x32xf32>
    %10 = arith.subf %7, %8 : vector<32x32xf32>
    %11 = arith.addf %9, %10 : vector<32x32xf32>
    %c0_9 = arith.constant 0 : index
    %c0_10 = arith.constant 0 : index
    %12 = vector.load %arg6[%c0_9, %c0_10] : memref<32x32xf32, #tpu.memory_space<vmem>>, vector<32x32xf32>
    tpu.vector_store %arg6[%c0_9, %c0_10], %11 {strides = array<i32>} : memref<32x32xf32, #tpu.memory_space<vmem>>, vector<32x32xf32>,
    %c0_i32_11 = arith.constant 0 : i32
    %13 = arith.cmpi eq, %arg2, %c0_i32_11 : i32
    %14 = arith.extui %13 : i1 to i32
    %c0_i32_12 = arith.constant 0 : i32
    %15 = arith.cmpi ne, %14, %c0_i32_12 : i32
    scf.if %15 {
      %c0_13 = arith.constant 0 : index
      %c0_14 = arith.constant 0 : index
      %16 = vector.load %arg6[%c0_13, %c0_14] : memref<32x32xf32, #tpu.memory_space<vmem>>, vector<32x32xf32>
      %c0_15 = arith.constant 0 : index
      %c0_16 = arith.constant 0 : index
      %c0_17 = arith.constant 0 : index
      %c0_18 = arith.constant 0 : index
      %17 = vector.load %arg5[%c0_15, %c0_16, %c0_17, %c0_18] : memref<1x1x32x32xf32, #tpu.memory_space<vmem>>, vector<1x1x32x32xf32>
      %18 = vector.shape_cast %17 : vector<1x1x32x32xf32> to vector<32x32xf32>
      %19 = vector.shape_cast %16 : vector<32x32xf32> to vector<1x1x32x32xf32>
      tpu.vector_store %arg5[%c0_15, %c0_16, %c0_17, %c0_18], %19 {strides = array<i32>} : memref<1x1x32x32xf32, #tpu.memory_space<vmem>>, vector<1x1x32x32xf32>,
    } else {
    }
    return
  }
  func.func @transform_0(%arg0: i32, %arg1: i32, %arg2: i32) -> (i32, i32, i32) {
    %c1_i32 = arith.constant 1 : i32
    %0 = arith.muli %arg0, %c1_i32 : i32
    %1 = arith.addi %0, %arg2 : i32
    %c0_i32 = arith.constant 0 : i32
    %c0_i32_0 = arith.constant 0 : i32
    return %arg1, %c0_i32, %1 : i32, i32, i32
  }
  func.func @transform_1(%arg0: i32, %arg1: i32, %arg2: i32) -> (i32, i32, i32) {
    %c1_i32 = arith.constant 1 : i32
    %0 = arith.muli %arg0, %c1_i32 : i32
    %1 = arith.addi %0, %arg2 : i32
    %c0_i32 = arith.constant 0 : i32
    %c0_i32_0 = arith.constant 0 : i32
    return %arg1, %c0_i32, %1 : i32, i32, i32
  }
  func.func @transform_2(%arg0: i32, %arg1: i32, %arg2: i32) -> (i32, i32, i32, i32) {
    %c0_i32 = arith.constant 0 : i32
    %c0_i32_0 = arith.constant 0 : i32
    %c0_i32_1 = arith.constant 0 : i32
    return %arg0, %arg1, %c0_i32, %c0_i32_0 : i32, i32, i32, i32
  }
}

</mosaic_0001>

<llo_original>
// kernel: tpu_custom_call.1
$region0: #{tpu_custom_call.1}
  #allocation0 [shape = 'u32[]', space=smem, size = 0x4, offset = 0x4, fixed_abs, tag = 'smem constant byte address 0x4 - core index']
  #allocation1 [shape = 'u32[72,128]{1,0:T(1,128)}', space=vmem, size = 0x9000, scoped, tag = 'internal scratch']
  #allocation2 [shape = 'f32[32,32]{1,0:T(8,128)}', space=vmem, size = 0x4000, scoped, tag = 'scratch operand']
  %s0 = inlined_call_operand.hbm [shape: f32[2,32,256], index: 0, kind: input, shape index: {}]
  %s1 = inlined_call_operand.hbm [shape: f32[2,32,256], index: 1, kind: input, shape index: {}]
  %s2 = inlined_call_operand.hbm [shape: f32[1,2,32,32], index: 2, kind: output, shape index: {}]
  %s3 = sld [smem:[#allocation0]]
  $region57: #{tpu_custom_call.1} parent=0
    _
  %s5 = ssub.s32 1, %s3
  %s6 = scalar_select 0, %s5, %s3
  $region1: #{tpu_custom_call.1} parent=0
    #allocation3 [shape = 'u8[65536]{0}', space=vmem, size = 0x10000, scoped, tag = 'input window, operand 0']
    #allocation4 [shape = 's32[2]{0}', space=sflag, size = 0x8, scoped, tag = 'scoped memory for tpu_custom_call.1']
    #allocation5 [shape = 's32[2]{0}', space=sflag, size = 0x8, scoped, tag = 'scoped memory for tpu_custom_call.1']
    #allocation6 [shape = 'u8[65536]{0}', space=vmem, size = 0x10000, scoped, tag = 'input window, operand 1']
    #allocation7 [shape = 's32[2]{0}', space=sflag, size = 0x8, scoped, tag = 'scoped memory for tpu_custom_call.1']
    #allocation8 [shape = 'u8[32768]{0}', space=vmem, size = 0x8000, scoped, tag = 'output window, operand 0']
    %7 = vsyncpa [#allocation4], 0
    %s8 = scalar_lea.sflag [#allocation4], 1
    %9 = vsyncpa %s8, 0
    %10 = vsyncpa [#allocation7], 0
    %s11 = scalar_lea.sflag [#allocation7], 1
    %12 = vsyncpa %s11, 0
    %13 = vsyncpa [#allocation5], 0
    %s14 = scalar_lea.sflag [#allocation5], 1
    %15 = vsyncpa %s14, 0
    loop: start=0, step=1, limit=4
    $region2: #{tpu_custom_call.1} parent=1 // loop_pre_header
      _
    $region3: #{tpu_custom_call.1} parent=1 // loop_header
      %s17 = sphi 0, %s21
      %p18 = scmp.ge.s32.totalorder %s17, 4
      %s24 = sphi 0, %s43
      %s25 = sphi 0, %s39
      %s26 = sphi 0, %s35
      %s27 = sphi 0, %s24
      %s28 = sphi 0, %s25
      %s29 = sphi 0, %s26
      %s30 = sphi 0, %s27
      %s31 = sphi 0, %s28
      %s32 = sphi 0, %s29
      %s50 = sphi 0, %s52
      %s53 = sphi 0, %s50
      %s54 = sphi 0, %s53
      %s70 = sphi 0, %s54
      %s80 = sphi 0, %s82
      %s83 = sphi 0, %s80
      %s84 = sphi 0, %s83
      %s100 = sphi 0, %s84
      %s108 = sphi 0, %s110
      %s111 = sphi 0, %s108
      %s112 = sphi 0, %s111
      %s128 = sphi 0, %s112
    $region4: #{tpu_custom_call.1} parent=1 // loop_header_branch
      %20 = sbr.rel (%p18) target = $region8
    $region5: #{tpu_custom_call.1} parent=1 // loop_body
      %s22 = ssub.s32 %s17, 1
      %s23 = ssub.s32 %s17, 2
      %s33 = sadd.s32 1, %s26
      %p34 = scmp.ge.s32.totalorder %s33, 1
      %s35 = scalar_select %p34, 0, %s33
      %s36 = sadd.s32 1, %s25
      %s37 = scalar_select %p34, %s36, %s25
      %p38 = scmp.ge.s32.totalorder %s37, 2
      %s39 = scalar_select %p38, 0, %s37
      %s40 = sadd.s32 1, %s24
      %s41 = scalar_select %p38, %s40, %s24
      %p42 = scmp.ge.s32.totalorder %s41, 1
      %s43 = scalar_select %p42, 0, %s41
      %s44 = sadd.s32 %s24, %s26
      %s45 = sadd.s32 %s43, %s35
      %s46 = ssub.s32 %s25, %s39
      %s47 = ssub.s32 %s44, %s45
      %s48 = sor.u32 %s46, %s47
      %p49 = scmp.eq.s32.totalorder %s48, 0
      %s51 = sadd.s32 %s50, 1
      %s52 = scalar_select %p49, %s50, %s51
      %p55 = pneg %p49
      %p56 = scmp.eq.s32.totalorder %s17, 1
      %p57 = por %p55, %p56
      %p58 = scmp.ne.s32.totalorder %s50, %s53
      %p59 = scmp.eq.s32.totalorder %s17, 0
      %p60 = por %p58, %p59
      %p61 = scmp.ne.s32.totalorder %s50, %s53
      %p62 = scmp.eq.s32.totalorder %s22, 1
      %p63 = por %p61, %p62
      %p64 = scmp.ne.s32.totalorder %s53, %s54
      %p65 = scmp.eq.s32.totalorder %s22, 0
      %p66 = por %p64, %p65
      %p67 = scmp.ne.s32.totalorder %s53, %s54
      %p68 = scmp.eq.s32.totalorder %s23, 1
      %p69 = por %p67, %p68
      %p71 = scmp.ne.s32.totalorder %s54, %s70
      %p72 = scmp.eq.s32.totalorder %s23, 0
      %p73 = por %p71, %p72
      %s74 = sadd.s32 %s24, %s26
      %s75 = sadd.s32 %s43, %s35
      %s76 = ssub.s32 %s25, %s39
      %s77 = ssub.s32 %s74, %s75
      %s78 = sor.u32 %s76, %s77
      %p79 = scmp.eq.s32.totalorder %s78, 0
      %s81 = sadd.s32 %s80, 1
      %s82 = scalar_select %p79, %s80, %s81
      %p85 = pneg %p79
      %p86 = scmp.eq.s32.totalorder %s17, 1
      %p87 = por %p85, %p86
      %p88 = scmp.ne.s32.totalorder %s80, %s83
      %p89 = scmp.eq.s32.totalorder %s17, 0
      %p90 = por %p88, %p89
      %p91 = scmp.ne.s32.totalorder %s80, %s83
      %p92 = scmp.eq.s32.totalorder %s22, 1
      %p93 = por %p91, %p92
      %p94 = scmp.ne.s32.totalorder %s83, %s84
      %p95 = scmp.eq.s32.totalorder %s22, 0
      %p96 = por %p94, %p95
      %p97 = scmp.ne.s32.totalorder %s83, %s84
      %p98 = scmp.eq.s32.totalorder %s23, 1
      %p99 = por %p97, %p98
      %p101 = scmp.ne.s32.totalorder %s84, %s100
      %p102 = scmp.eq.s32.totalorder %s23, 0
      %p103 = por %p101, %p102
      %s104 = ssub.s32 %s24, %s43
      %s105 = ssub.s32 %s25, %s39
      %s106 = sor.u32 %s104, %s105
      %p107 = scmp.eq.s32.totalorder %s106, 0
      %s109 = sadd.s32 %s108, 1
      %s110 = scalar_select %p107, %s108, %s109
      %p113 = pneg %p107
      %p114 = scmp.eq.s32.totalorder %s17, 1
      %p115 = por %p113, %p114
      %p116 = scmp.ne.s32.totalorder %s108, %s111
      %p117 = scmp.eq.s32.totalorder %s17, 0
      %p118 = por %p116, %p117
      %p119 = scmp.ne.s32.totalorder %s108, %s111
      %p120 = scmp.eq.s32.totalorder %s22, 1
      %p121 = por %p119, %p120
      %p122 = scmp.ne.s32.totalorder %s111, %s112
      %p123 = scmp.eq.s32.totalorder %s22, 0
      %p124 = por %p122, %p123
      %p125 = scmp.ne.s32.totalorder %s111, %s112
      %p126 = scmp.eq.s32.totalorder %s23, 1
      %p127 = por %p125, %p126
      %p129 = scmp.ne.s32.totalorder %s112, %s128
      %p130 = scmp.eq.s32.totalorder %s23, 0
      %p131 = por %p129, %p130
      %p132 = scmp.le.s32.totalorder 1, %s17
      %p133 = scmp.lt.s32.totalorder %s17, 3
      %p134 = pnand %p132, %p133
      %p135 = pneg %p134
      // Predicated region
      $region9: #{tpu_custom_call.1} parent=5 // pred_check
        _
      $region10: #{tpu_custom_call.1} parent=5 // pred_check_branch
        %137 = sbr.rel (%p134) target = $region12
      $region11: #{tpu_custom_call.1} parent=5 // pred_region
        %s138 = ssub.s32 %s17, 1
      $region12: #{tpu_custom_call.1} parent=5 // pred_fallthru
        _
      %p139 = scmp.lt.s32.totalorder %s17, 2
      // Predicated region
      $region13: #{tpu_custom_call.1} parent=5 // pred_check
        %p140 = pneg %p139
      $region14: #{tpu_custom_call.1} parent=5 // pred_check_branch
        %142 = sbr.rel (%p140) target = $region16
      $region15: #{tpu_custom_call.1} parent=5 // pred_region
        // Predicated region
        $region17: #{tpu_custom_call.1} parent=15 // pred_check
          %p143 = pneg %p60
        $region18: #{tpu_custom_call.1} parent=15 // pred_check_branch
          %145 = sbr.rel (%p143) target = $region20
        $region19: #{tpu_custom_call.1} parent=15 // pred_region
          %s146 = sand.u32 %s50, 1
          %s147 = scalar_lea.sflag [#allocation4], %s146
          %s148 = sand.u32 %s50, 1
          %s149 = smul.addr %s148, 64
          %s150 = scalar_lea.vmem [#allocation3], %s149
          %s151 = sadd.s32 %s24, %s26
          %s152 = smul.u32 2, %s151
          %154 = vsyncadd %s147, 0
          %s155 = smul.addr %s25, 8
          %s156 = sadd.s32 %s152, %s155
          %s157 = smul.addr %s156, 8
          %s158 = scalar_lea.hbm %s0, %s157
          %s159 = sshll.u32 %s158, 4
          %s160 = int_to_ptr.hbm [resolvable:$true] %s159
          %s161 = sshll.u32 %s150, 4
          %s162 = int_to_ptr.vmem [resolvable:$true] %s161
          %167 = dma.hbm_to_vmem [thread:$0]  %s160, 1024, %s162, %s147, 256, 256, 16
        $region20: #{tpu_custom_call.1} parent=15 // pred_fallthru
          _
        // Predicated region
        $region21: #{tpu_custom_call.1} parent=15 // pred_check
          %p168 = pneg %p90
        $region22: #{tpu_custom_call.1} parent=15 // pred_check_branch
          %170 = sbr.rel (%p168) target = $region24
        $region23: #{tpu_custom_call.1} parent=15 // pred_region
          %s171 = sand.u32 %s80, 1
          %s172 = scalar_lea.sflag [#allocation7], %s171
          %s173 = sand.u32 %s80, 1
          %s174 = smul.addr %s173, 64
          %s175 = scalar_lea.vmem [#allocation6], %s174
          %s176 = sadd.s32 %s24, %s26
          %s177 = smul.u32 2, %s176
          %179 = vsyncadd %s172, 0
          %s180 = smul.addr %s25, 8
          %s181 = sadd.s32 %s177, %s180
          %s182 = smul.addr %s181, 8
          %s183 = scalar_lea.hbm %s1, %s182
          %s184 = sshll.u32 %s183, 4
          %s185 = int_to_ptr.hbm [resolvable:$true] %s184
          %s186 = sshll.u32 %s175, 4
          %s187 = int_to_ptr.vmem [resolvable:$true] %s186
          %192 = dma.hbm_to_vmem [thread:$0]  %s185, 1024, %s187, %s172, 256, 256, 16
        $region24: #{tpu_custom_call.1} parent=15 // pred_fallthru
          _
      $region16: #{tpu_custom_call.1} parent=5 // pred_fallthru
        _
      %p193 = scmp.le.s32.totalorder 1, %s17
      %p194 = scmp.lt.s32.totalorder %s17, 3
      %p195 = pnand %p193, %p194
      %p196 = pneg %p195
      // Predicated region
      $region25: #{tpu_custom_call.1} parent=5 // pred_check
        _
      $region26: #{tpu_custom_call.1} parent=5 // pred_check_branch
        %198 = sbr.rel (%p195) target = $region28
      $region27: #{tpu_custom_call.1} parent=5 // pred_region
        %s199 = ssub.s32 %s17, 1
        %s200 = sand.u32 %s53, 1
        %s201 = scalar_lea.sflag [#allocation4], %s200
        %s202 = sand.u32 %s53, 1
        %s203 = smul.addr %s202, 64
        %s204 = scalar_lea.vmem [#allocation3], %s203
        // Predicated region
        $region29: #{tpu_custom_call.1} parent=27 // pred_check
          %p205 = pneg %p66
        $region30: #{tpu_custom_call.1} parent=27 // pred_check_branch
          %207 = sbr.rel (%p205) target = $region32
        $region31: #{tpu_custom_call.1} parent=27 // pred_region
          %209 = dma.done %s201, 1024
        $region32: #{tpu_custom_call.1} parent=27 // pred_fallthru
          _
        %s210 = sand.u32 %s83, 1
        %s211 = scalar_lea.sflag [#allocation7], %s210
        %s212 = sand.u32 %s83, 1
        %s213 = smul.addr %s212, 64
        %s214 = scalar_lea.vmem [#allocation6], %s213
        // Predicated region
        $region33: #{tpu_custom_call.1} parent=27 // pred_check
          %p215 = pneg %p96
        $region34: #{tpu_custom_call.1} parent=27 // pred_check_branch
          %217 = sbr.rel (%p215) target = $region36
        $region35: #{tpu_custom_call.1} parent=27 // pred_region
          %219 = dma.done %s211, 1024
        $region36: #{tpu_custom_call.1} parent=27 // pred_fallthru
          _
        %s220 = sand.u32 %s53, 1
        %s221 = scalar_lea.sflag [#allocation4], %s220
        %s222 = sand.u32 %s53, 1
        %s223 = smul.addr %s222, 64
        %s224 = scalar_lea.vmem [#allocation3], %s223
        %p225 = pneg %p66
        %p226 = pneg %p63
        %s227 = sand.u32 %s83, 1
        %s228 = scalar_lea.sflag [#allocation7], %s227
        %s229 = sand.u32 %s83, 1
        %s230 = smul.addr %s229, 64
        %s231 = scalar_lea.vmem [#allocation6], %s230
        %p232 = pneg %p96
        %p233 = pneg %p93
        %p234 = pneg %p124
        %p235 = pneg %p121
        %s236 = sand.u32 %s111, 1
        %s237 = scalar_lea.sflag [#allocation5], %s236
        %s238 = sand.u32 %s111, 1
        %s239 = smul.addr %s238, 32
        %s240 = scalar_lea.vmem [#allocation8], %s239
        %s241 = sadd.s32 %s27, %s29
        %s242 = smul.u32 2, %s241
        %s243 = sadd.s32 %s27, %s29
        %s244 = smul.u32 2, %s243
        %p245 = scmp.eq.s32.totalorder %s29, 0
        // Predicated region
        $region37: #{tpu_custom_call.1} parent=27 // pred_check
          %p246 = pneg %p245
        $region38: #{tpu_custom_call.1} parent=27 // pred_check_branch
          %248 = sbr.rel (%p246) target = $region40
        $region39: #{tpu_custom_call.1} parent=27 // pred_region
          %vm249 = vcmask 261120
          %250 = vst.msk [vmem:[#allocation2] sm:$0xff] %vm249, 0.0
          %251 = vst.msk [vmem:[#allocation2 + $0x8] sm:$0xff] %vm249, 0.0
          %252 = vst.msk [vmem:[#allocation2 + $0x10] sm:$0xff] %vm249, 0.0
          %253 = vst.msk [vmem:[#allocation2 + $0x18] sm:$0xff] %vm249, 0.0
        $region40: #{tpu_custom_call.1} parent=27 // pred_fallthru
          _
        %v254 = vld [vmem:[%s204] sm:$0xff]
        %v255 = vld [vmem:[%s204 + $0x8] sm:$0xff]
        %v256 = vld [vmem:[%s204 + $0x10] sm:$0xff]
        %v257 = vld [vmem:[%s204 + $0x18] sm:$0xff]
        %v258 = vld [vmem:[%s204 + $0x20] sm:$0xff]
        %v259 = vld [vmem:[%s204 + $0x28] sm:$0xff]
        %v260 = vld [vmem:[%s204 + $0x30] sm:$0xff]
        %v261 = vld [vmem:[%s204 + $0x38] sm:$0xff]
        %v262 = vld [vmem:[%s214] sm:$0xff]
        %v263 = vld [vmem:[%s214 + $0x8] sm:$0xff]
        %v264 = vld [vmem:[%s214 + $0x10] sm:$0xff]
        %v265 = vld [vmem:[%s214 + $0x18] sm:$0xff]
        %v266 = vld [vmem:[%s214 + $0x20] sm:$0xff]
        %v267 = vld [vmem:[%s214 + $0x28] sm:$0xff]
        %v268 = vld [vmem:[%s214 + $0x30] sm:$0xff]
        %v269 = vld [vmem:[%s214 + $0x38] sm:$0xff]
        %270 = vmatpush.xpose.msra.mxu0 0.0
        %271 = vmatpush.xpose.msra.mxu0 0.0
        %272 = vmatpush.xpose.msra.mxu0 0.0
        %273 = vmatpush.xpose.msra.mxu0 0.0
        %274 = vmatpush.xpose.msra.mxu0 0.0
        %275 = vmatpush.xpose.msra.mxu0 0.0
        %276 = vmatpush.xpose.msra.mxu0 0.0
        %277 = vmatpush.xpose.msra.mxu0 0.0
        %278 = vmatpush.xpose.msra.mxu0 0.0
        %279 = vmatpush.xpose.msra.mxu0 0.0
        %280 = vmatpush.xpose.msra.mxu0 0.0
        %281 = vmatpush.xpose.msra.mxu0 0.0
        %282 = vmatpush.xpose.msra.mxu0 %v260
        %283 = vmatpush.xpose.msra.mxu0 %v258
        %284 = vmatpush.xpose.msra.mxu0 %v256
        %285 = vmatpush.xpose.msra.mxu0 %v254
        %286 = vmatmul.f32.gmra.mxu0 %v254
        %v287 = vpop.f32.mrf.mxu0
        %v288 = vadd.f32 0.0, %v287
        %289 = vmatmul.f32.gmra.mxu0 %v256
        %v290 = vpop.f32.mrf.mxu0
        %v291 = vadd.f32 0.0, %v290
        %292 = vmatmul.f32.gmra.mxu0 %v258
        %v293 = vpop.f32.mrf.mxu0
        %v294 = vadd.f32 0.0, %v293
        %295 = vmatmul.f32.gmra.mxu0 %v260
        %v296 = vpop.f32.mrf.mxu0
        %v297 = vadd.f32 0.0, %v296
        %298 = vdwg.mxu0
        %299 = vmatpush.xpose.msra.mxu0 0.0
        %300 = vmatpush.xpose.msra.mxu0 0.0
        %301 = vmatpush.xpose.msra.mxu0 0.0
        %302 = vmatpush.xpose.msra.mxu0 0.0
        %303 = vmatpush.xpose.msra.mxu0 0.0
        %304 = vmatpush.xpose.msra.mxu0 0.0
        %305 = vmatpush.xpose.msra.mxu0 0.0
        %306 = vmatpush.xpose.msra.mxu0 0.0
        %307 = vmatpush.xpose.msra.mxu0 0.0
        %308 = vmatpush.xpose.msra.mxu0 0.0
        %309 = vmatpush.xpose.msra.mxu0 0.0
        %310 = vmatpush.xpose.msra.mxu0 0.0
        %311 = vmatpush.xpose.msra.mxu0 %v261
        %312 = vmatpush.xpose.msra.mxu0 %v259
        %313 = vmatpush.xpose.msra.mxu0 %v257
        %314 = vmatpush.xpose.msra.mxu0 %v255
        %315 = vmatmul.f32.gmra.mxu0 %v255
        %v316 = vpop.f32.mrf.mxu0
        %v317 = vadd.f32 %v288, %v316
        %318 = vmatmul.f32.gmra.mxu0 %v257
        %v319 = vpop.f32.mrf.mxu0
        %v320 = vadd.f32 %v291, %v319
        %321 = vmatmul.f32.gmra.mxu0 %v259
        %v322 = vpop.f32.mrf.mxu0
        %v323 = vadd.f32 %v294, %v322
        %324 = vmatmul.f32.gmra.mxu0 %v261
        %v325 = vpop.f32.mrf.mxu0
        %v326 = vadd.f32 %v297, %v325
        %327 = vdwg.mxu0
        %328 = vmatpush.xpose.msra.mxu0 0.0
        %329 = vmatpush.xpose.msra.mxu0 0.0
        %330 = vmatpush.xpose.msra.mxu0 0.0
        %331 = vmatpush.xpose.msra.mxu0 0.0
        %332 = vmatpush.xpose.msra.mxu0 0.0
        %333 = vmatpush.xpose.msra.mxu0 0.0
        %334 = vmatpush.xpose.msra.mxu0 0.0
        %335 = vmatpush.xpose.msra.mxu0 0.0
        %336 = vmatpush.xpose.msra.mxu0 0.0
        %337 = vmatpush.xpose.msra.mxu0 0.0
        %338 = vmatpush.xpose.msra.mxu0 0.0
        %339 = vmatpush.xpose.msra.mxu0 0.0
        %340 = vmatpush.xpose.msra.mxu0 %v268
        %341 = vmatpush.xpose.msra.mxu0 %v266
        %342 = vmatpush.xpose.msra.mxu0 %v264
        %343 = vmatpush.xpose.msra.mxu0 %v262
        %344 = vmatmul.f32.gmra.mxu0 %v262
        %v345 = vpop.f32.mrf.mxu0
        %v346 = vadd.f32 0.0, %v345
        %347 = vmatmul.f32.gmra.mxu0 %v264
        %v348 = vpop.f32.mrf.mxu0
        %v349 = vadd.f32 0.0, %v348
        %350 = vmatmul.f32.gmra.mxu0 %v266
        %v351 = vpop.f32.mrf.mxu0
        %v352 = vadd.f32 0.0, %v351
        %353 = vmatmul.f32.gmra.mxu0 %v268
        %v354 = vpop.f32.mrf.mxu0
        %v355 = vadd.f32 0.0, %v354
        %356 = vdwg.mxu0
        %357 = vmatpush.xpose.msra.mxu0 0.0
        %358 = vmatpush.xpose.msra.mxu0 0.0
        %359 = vmatpush.xpose.msra.mxu0 0.0
        %360 = vmatpush.xpose.msra.mxu0 0.0
        %361 = vmatpush.xpose.msra.mxu0 0.0
        %362 = vmatpush.xpose.msra.mxu0 0.0
        %363 = vmatpush.xpose.msra.mxu0 0.0
        %364 = vmatpush.xpose.msra.mxu0 0.0
        %365 = vmatpush.xpose.msra.mxu0 0.0
        %366 = vmatpush.xpose.msra.mxu0 0.0
        %367 = vmatpush.xpose.msra.mxu0 0.0
        %368 = vmatpush.xpose.msra.mxu0 0.0
        %369 = vmatpush.xpose.msra.mxu0 %v269
        %370 = vmatpush.xpose.msra.mxu0 %v267
        %371 = vmatpush.xpose.msra.mxu0 %v265
        %372 = vmatpush.xpose.msra.mxu0 %v263
        %373 = vmatmul.f32.gmra.mxu0 %v263
        %v374 = vpop.f32.mrf.mxu0
        %v375 = vadd.f32 %v346, %v374
        %376 = vmatmul.f32.gmra.mxu0 %v265
        %v377 = vpop.f32.mrf.mxu0
        %v378 = vadd.f32 %v349, %v377
        %379 = vmatmul.f32.gmra.mxu0 %v267
        %v380 = vpop.f32.mrf.mxu0
        %v381 = vadd.f32 %v352, %v380
        %382 = vmatmul.f32.gmra.mxu0 %v269
        %v383 = vpop.f32.mrf.mxu0
        %v384 = vadd.f32 %v355, %v383
        %385 = vdwg.mxu0
        %v386 = vld [vmem:[#allocation2] sm:$0xff]
        %v387 = vld [vmem:[#allocation2 + $0x8] sm:$0xff]
        %v388 = vld [vmem:[#allocation2 + $0x10] sm:$0xff]
        %v389 = vld [vmem:[#allocation2 + $0x18] sm:$0xff]
        %v390 = vsub.f32 %v317, %v375
        %v391 = vsub.f32 %v320, %v378
        %v392 = vsub.f32 %v323, %v381
        %v393 = vsub.f32 %v326, %v384
        %v394 = vadd.f32 %v386, %v390
        %v395 = vadd.f32 %v387, %v391
        %v396 = vadd.f32 %v388, %v392
        %v397 = vadd.f32 %v389, %v393
        %vm398 = vcmask 261120
        %399 = vst.msk [vmem:[#allocation2] sm:$0xff] %vm398, %v394
        %400 = vst.msk [vmem:[#allocation2 + $0x8] sm:$0xff] %vm398, %v395
        %401 = vst.msk [vmem:[#allocation2 + $0x10] sm:$0xff] %vm398, %v396
        %402 = vst.msk [vmem:[#allocation2 + $0x18] sm:$0xff] %vm398, %v397
        // Predicated region
        $region41: #{tpu_custom_call.1} parent=27 // pred_check
          %p403 = pneg %p245
        $region42: #{tpu_custom_call.1} parent=27 // pred_check_branch
          %405 = sbr.rel (%p403) target = $region44
        $region43: #{tpu_custom_call.1} parent=27 // pred_region
          %v406 = vld [vmem:[#allocation2] sm:$0xff]
          %v407 = vld [vmem:[#allocation2 + $0x8] sm:$0xff]
          %v408 = vld [vmem:[#allocation2 + $0x10] sm:$0xff]
          %v409 = vld [vmem:[#allocation2 + $0x18] sm:$0xff]
          %410 = vst.msk [vmem:[%s240] sm:$0xff] %vm398, %v406
          %411 = vst.msk [vmem:[%s240 + $0x8] sm:$0xff] %vm398, %v407
          %412 = vst.msk [vmem:[%s240 + $0x10] sm:$0xff] %vm398, %v408
          %413 = vst.msk [vmem:[%s240 + $0x18] sm:$0xff] %vm398, %v409
        $region44: #{tpu_custom_call.1} parent=27 // pred_fallthru
          _
        %s414 = sand.u32 %s111, 1
        %s415 = scalar_lea.sflag [#allocation5], %s414
        %s416 = sand.u32 %s111, 1
        %s417 = smul.addr %s416, 32
        %s418 = scalar_lea.vmem [#allocation8], %s417
        // Predicated region
        $region45: #{tpu_custom_call.1} parent=27 // pred_check
          %p419 = pneg %p121
        $region46: #{tpu_custom_call.1} parent=27 // pred_check_branch
          %421 = sbr.rel (%p419) target = $region48
        $region47: #{tpu_custom_call.1} parent=27 // pred_region
          %423 = vsyncadd %s415, 0
          %s424 = smul.addr %s28, 4
          %s425 = smul.addr %s27, 8
          %s426 = sadd.s32 %s424, %s425
          %s427 = smul.addr %s426, 8
          %s428 = scalar_lea.hbm %s2, %s427
          %s429 = sshll.u32 %s418, 4
          %s430 = int_to_ptr.vmem [resolvable:$true] %s429
          %s431 = sshll.u32 %s428, 4
          %s432 = int_to_ptr.hbm [resolvable:$true] %s431
          %437 = dma.vmem_to_hbm [thread:$0]  %s430, 512, %s432, %s415, 128, 128, 8
        $region48: #{tpu_custom_call.1} parent=27 // pred_fallthru
          _
      $region28: #{tpu_custom_call.1} parent=5 // pred_fallthru
        _
      %p438 = scmp.le.s32.totalorder 2, %s17
      // Predicated region
      $region49: #{tpu_custom_call.1} parent=5 // pred_check
        %p439 = pneg %p438
      $region50: #{tpu_custom_call.1} parent=5 // pred_check_branch
        %441 = sbr.rel (%p439) target = $region52
      $region51: #{tpu_custom_call.1} parent=5 // pred_region
        %s442 = ssub.s32 %s17, 2
        // Predicated region
        $region53: #{tpu_custom_call.1} parent=51 // pred_check
          %p443 = pneg %p127
        $region54: #{tpu_custom_call.1} parent=51 // pred_check_branch
          %445 = sbr.rel (%p443) target = $region56
        $region55: #{tpu_custom_call.1} parent=51 // pred_region
          %s446 = sand.u32 %s112, 1
          %s447 = scalar_lea.sflag [#allocation5], %s446
          %s448 = sand.u32 %s112, 1
          %s449 = smul.addr %s448, 32
          %s450 = scalar_lea.vmem [#allocation8], %s449
          %452 = dma.done %s447, 512
        $region56: #{tpu_custom_call.1} parent=51 // pred_fallthru
          _
      $region52: #{tpu_custom_call.1} parent=5 // pred_fallthru
        _
    $region6: #{tpu_custom_call.1} parent=1 // loop_footer
      %s21 = sadd.s32 1, %s17
    $region7: #{tpu_custom_call.1} parent=1 // loop_footer_branch
      %16 = sbr.rel target = $region3
    $region8: #{tpu_custom_call.1} parent=1 // loop_exit
      _
    %453 = vsyncpa [#allocation4], 1
    %s454 = scalar_lea.sflag [#allocation4], 1
    %455 = vsyncpa %s454, 1
    %456 = vsyncpa [#allocation7], 1
    %s457 = scalar_lea.sflag [#allocation7], 1
    %458 = vsyncpa %s457, 1
    %459 = vsyncpa [#allocation5], 1
    %s460 = scalar_lea.sflag [#allocation5], 1
    %461 = vsyncpa %s460, 1

</llo_original>
